<compile_context>
chip_gen: v7x
topology: tpu7x:2x2x1
jax: 0.10.0
libtpu: 0.0.40
codegen_flags: <defaults>
</compile_context>

<pallas_src>
import jax
import jax.numpy as jnp
from jax.experimental import pallas as pl
from jax.experimental.pallas import tpu as pltpu


def _build_pe_table(d_model: int, max_len: int = 5000,
                    dtype=jnp.float32) -> jnp.ndarray:
    """Deterministic sinusoidal table, identical to the PyTorch __init__.
    Built once at init time in the activation dtype (no per-forward cast)."""
    position = jnp.arange(0, max_len, dtype=jnp.float32)[:, None]            # (max_len, 1)
    div_term = jnp.exp(
        jnp.arange(0, d_model, 2, dtype=jnp.float32)
        * -(jnp.log(jnp.float32(10000.0)) / d_model))                        # (ceil(d/2),)
    pe = jnp.zeros((max_len, d_model), dtype=jnp.float32)
    pe = pe.at[:, 0::2].set(jnp.sin(position * div_term))
    pe = pe.at[:, 1::2].set(jnp.cos(position * div_term)[:, : d_model // 2])
    return pe[None, :, :].astype(dtype)                                      # (1, max_len, d_model)


def _add_pe_kernel(x_ref, pe_ref, o_ref):
    # (TB, TC) + (1, TC): pe broadcasts over the batch rows of the block.
    # Pure HBM-bandwidth-bound elementwise add; cast (if any) rides free on the VPU.
    o_ref[...] = (x_ref[...] + pe_ref[...]).astype(o_ref.dtype)


def _pick_tiles(B: int, L: int, itemsize: int,
                vmem_budget_bytes: int = 10 << 20):
    """Pick (TB, TC) for the flattened (B, L) view.

    TB (sublane axis): multiple of the dtype sublane count, or the full batch dim.
    TC (lane axis): multiple of 128 (or the full dim), sized so the double-buffered
    footprint 2 * itemsize * TC * (2*TB + 1)  (x, out, pe) stays under ~10 MiB —
    safe under the 16 MiB scoped-VMEM default on v5e and 32 MiB on v6e/v7x.
    Tail blocks along either axis are masked by Pallas (cdiv grids)."""
    sublane = {4: 8, 2: 16, 1: 32}.get(itemsize, 8)
    lane = 128
    tb = B if B <= sublane else min(B // sublane, 4) * sublane
    tc = vmem_budget_bytes // (2 * itemsize * (2 * tb + 1))
    tc = max(lane, (tc // lane) * lane)
    if tc >= L:
        tc = L                                     # block dim == full dim is always legal
        # Keep >= 2 grid steps along a parallel axis so both v7x TensorCores get work.
        if B <= tb and L > 2 * lane:
            tc = pl.cdiv((L + 1) // 2, lane) * lane
    return tb, tc


@jax.jit
def positional_encoding_forward(x: jnp.ndarray, pe: jnp.ndarray) -> jnp.ndarray:
    """x: (B, S, D); pe: (1, max_len, D) pre-built in the activation dtype.
    Returns x + pe[:, :S] with x's dtype."""
    B, S, D = x.shape
    L = S * D
    itemsize = jnp.dtype(x.dtype).itemsize

    x2 = x.reshape(B, L)                       # contiguous -> layout-free bitcast
    pe2 = pe[:, :S, :].reshape(1, L)           # small static slice, no dtype cast

    tb, tc = _pick_tiles(B, L, itemsize)
    grid = (pl.cdiv(L, tc), pl.cdiv(B, tb))    # pe-varying axis OUTER, batch INNER
                                               # -> pe block index constant across the
                                               #    inner axis, so it is not re-DMA'd.

    out = pl.pallas_call(
        _add_pe_kernel,
        out_shape=jax.ShapeDtypeStruct((B, L), x.dtype),
        grid_spec=pltpu.PrefetchScalarGridSpec(
            num_scalar_prefetch=0,
            grid=grid,
            in_specs=[
                pl.BlockSpec((tb, tc), lambda t, b: (b, t)),   # x
                pl.BlockSpec((1, tc), lambda t, b: (0, t)),    # pe (shared over batch)
            ],
            out_specs=pl.BlockSpec((tb, tc), lambda t, b: (b, t)),
        ),
        compiler_params=pltpu.CompilerParams(
            dimension_semantics=("parallel", "parallel"),
        ),
        cost_estimate=pl.CostEstimate(
            flops=B * L,
            transcendentals=0,
            bytes_accessed=(2 * B * L + L) * itemsize,
        ),
    )(x2, pe2)

    return out.reshape(B, S, D)


if __name__ == "__main__":
    key = jax.random.PRNGKey(0)
    MAX_LEN = 64

    # Primary small test: batch=2, seq=8, d_model=32 (S*D = 256, lane-aligned).
    B, S, D = 2, 8, 32
    x = jax.random.normal(key, (B, S, D), dtype=jnp.float32)
    pe = _build_pe_table(D, MAX_LEN, dtype=jnp.float32)
    out = jax.block_until_ready(positional_encoding_forward(x, pe))
    ref = x + pe[:, :S, :]
    assert out.shape == (B, S, D)
    assert jnp.allclose(out, ref, atol=1e-6), "mismatch vs reference (lane-aligned path)"

    # Masked-tail test: S*D = 600 is NOT a multiple of 128, and B > sublane count
    # so the batch axis also has a partial tail block.
    B2, S2, D2 = 10, 15, 40
    x2 = jax.random.normal(jax.random.PRNGKey(1), (B2, S2, D2), dtype=jnp.float32)
    pe2 = _build_pe_table(D2, MAX_LEN, dtype=jnp.float32)
    out2 = jax.block_until_ready(positional_encoding_forward(x2, pe2))
    ref2 = x2 + pe2[:, :S2, :]
    assert out2.shape == (B2, S2, D2)
    assert jnp.allclose(out2, ref2, atol=1e-6), "mismatch vs reference (masked-tail path)"

    # bf16 activation path: pe pre-built in bf16 at init (no per-call cast); note this
    # adds in bf16 (one extra rounding vs f32-accumulate-then-downcast references).
    B3, S3, D3 = 4, 12, 48
    x3 = jax.random.normal(jax.random.PRNGKey(2), (B3, S3, D3), dtype=jnp.bfloat16)
    pe3 = _build_pe_table(D3, MAX_LEN, dtype=jnp.bfloat16)
    out3 = jax.block_until_ready(positional_encoding_forward(x3, pe3))
    ref3 = x3 + pe3[:, :S3, :]
    assert out3.shape == (B3, S3, D3)
    assert jnp.allclose(out3.astype(jnp.float32), ref3.astype(jnp.float32), atol=1e-2), \
        "mismatch vs reference (bf16 path)"

    print("KERNEL_OK")
</pallas_src>

<mosaic_0001>
module attributes {stable_mosaic.version = 11 : i64} {
  func.func @_add_pe_kernel(%arg0: i32, %arg1: i32, %arg2: memref<2x256xf32, #tpu.memory_space<vmem>>, %arg3: memref<1x256xf32, #tpu.memory_space<vmem>>, %arg4: memref<2x256xf32, #tpu.memory_space<vmem>>) attributes {dimension_semantics = [#tpu.dimension_semantics<parallel>, #tpu.dimension_semantics<parallel>], iteration_bounds = array<i64: 1, 1>, scalar_prefetch = 0 : i64, scratch_operands = 0 : i64, tpu.core_type = #tpu.core_type<tc>, window_params = [{transform_indices = @transform_0, window_bounds = array<i64: 2, 256>}, {transform_indices = @transform_1, window_bounds = array<i64: 1, 256>}, {transform_indices = @transform_2, window_bounds = array<i64: 2, 256>}]} {
    %c0 = arith.constant 0 : index
    %c0_0 = arith.constant 0 : index
    %0 = vector.load %arg2[%c0, %c0_0] : memref<2x256xf32, #tpu.memory_space<vmem>>, vector<2x256xf32>
    %c0_1 = arith.constant 0 : index
    %c0_2 = arith.constant 0 : index
    %1 = vector.load %arg3[%c0_1, %c0_2] : memref<1x256xf32, #tpu.memory_space<vmem>>, vector<1x256xf32>
    %2 = vector.broadcast %1 : vector<1x256xf32> to vector<2x256xf32>
    %3 = arith.addf %0, %2 : vector<2x256xf32>
    %c0_3 = arith.constant 0 : index
    %c0_4 = arith.constant 0 : index
    %4 = vector.load %arg4[%c0_3, %c0_4] : memref<2x256xf32, #tpu.memory_space<vmem>>, vector<2x256xf32>
    tpu.vector_store %arg4[%c0_3, %c0_4], %3 {strides = array<i32>} : memref<2x256xf32, #tpu.memory_space<vmem>>, vector<2x256xf32>,
    return
  }
  func.func @transform_0(%arg0: i32, %arg1: i32) -> (i32, i32) {
    %c0_i32 = arith.constant 0 : i32
    return %arg1, %arg0 : i32, i32
  }
  func.func @transform_1(%arg0: i32, %arg1: i32) -> (i32, i32) {
    %c0_i32 = arith.constant 0 : i32
    %c0_i32_0 = arith.constant 0 : i32
    return %c0_i32, %arg0 : i32, i32
  }
  func.func @transform_2(%arg0: i32, %arg1: i32) -> (i32, i32) {
    %c0_i32 = arith.constant 0 : i32
    return %arg1, %arg0 : i32, i32
  }
}

</mosaic_0001>

<llo_original>
// kernel: positional_encoding_forward.1
$region0: #{positional_encoding_forward.1}
  #allocation0 [shape = 'u32[]', space=smem, size = 0x4, offset = 0x4, fixed_abs, tag = 'smem constant byte address 0x4 - core index']
  #allocation1 [shape = 'u32[144,128]{1,0:T(1,128)}', space=vmem, size = 0x12000, scoped, tag = 'internal scratch']
  %s0 = inlined_call_operand.vmem [shape: f32[2,256], index: 0, kind: input, shape index: {}]
  %s1 = inlined_call_operand.vmem [shape: f32[1,256], index: 1, kind: input, shape index: {}]
  %s2 = inlined_call_operand.vmem [shape: f32[2,256], index: 2, kind: output, shape index: {}]
  %s3 = sld [smem:[#allocation0]]
  $region18: #{positional_encoding_forward.1} parent=0
    _
  %s5 = ssub.s32 1, %s3
  %s6 = scalar_select 0, %s5, %s3
  // Predicated region
  $region2: #{positional_encoding_forward.1} parent=0 // pred_check
    _
  $region3: #{positional_encoding_forward.1} parent=0 // pred_check_branch
    %8 = sbr.rel (0) target = $region5
  $region4: #{positional_encoding_forward.1} parent=0 // pred_region
    _
  $region5: #{positional_encoding_forward.1} parent=0 // pred_fallthru
    _
  // Predicated region
  $region6: #{positional_encoding_forward.1} parent=0 // pred_check
    _
  $region7: #{positional_encoding_forward.1} parent=0 // pred_check_branch
    %10 = sbr.rel (0) target = $region9
  $region8: #{positional_encoding_forward.1} parent=0 // pred_region
    _
  $region9: #{positional_encoding_forward.1} parent=0 // pred_fallthru
    _
  %v11 = vld [vmem:[%s0] sm:$0xf]
  %v12 = vld [vmem:[%s1] sm:$0x3]
  %v14 = vlaneseq
  %v15 = vshrl.u32 %v14, 7
  %v16 = vsub.s32 0, %v15
  %v17 = vrot.slane %v12, %v16
  %v18 = vlaneseq
  %v19 = vshrl.u32 %v18, 7
  %v20 = vsub.s32 1, %v19
  %v21 = vrot.slane %v12, %v20
  %v22 = vcombine.low %v17, %v21
  %v24 = vunpack.c.l.s4 1983009808
  %v25 = vunpack.c.0.s8 %v24
  %v26 = vlaneseq
  %v27 = vshrl.u32 %v26, 7
  %v28 = vsub.s32 %v25, %v27
  %v29 = vrot.slane %v22, %v28
  %v31 = vadd.f32 %v11, %v29
  %32 = vst [vmem:[%s2] sm:$0xf] %v31
  // Predicated region
  $region10: #{positional_encoding_forward.1} parent=0 // pred_check
    _
  $region11: #{positional_encoding_forward.1} parent=0 // pred_check_branch
    %34 = sbr.rel (0) target = $region13
  $region12: #{positional_encoding_forward.1} parent=0 // pred_region
    _
  $region13: #{positional_encoding_forward.1} parent=0 // pred_fallthru
    _
  // Predicated region
  $region14: #{positional_encoding_forward.1} parent=0 // pred_check
    _
  $region15: #{positional_encoding_forward.1} parent=0 // pred_check_branch
    %36 = sbr.rel (0) target = $region17
  $region16: #{positional_encoding_forward.1} parent=0 // pred_region
    _
  $region17: #{positional_encoding_forward.1} parent=0 // pred_fallthru
    _

</llo_original>
